<compile_context>
chip_gen: v7x
topology: tpu7x:2x2x1
jax: 0.10.0
libtpu: 0.0.40
codegen_flags: <defaults>
</compile_context>

<pallas_src>
import math

import jax
import jax.numpy as jnp
from jax.experimental import pallas as pl
from jax.experimental.pallas import tpu as pltpu


# ----------------------------------------------------------------------------- #
# Fused CBAM kernel: one grid step = one batch item, layout (C, H*W)
# ----------------------------------------------------------------------------- #
def cbam_kernel(f_ref, w1_ref, w2_ref, kcat_ref, out_ref):
    f = f_ref[0]                                   # (C, HW) float32
    C, HW = f.shape

    # ---- Channel attention: global avg/max pool over H*W (lane reduce) ----
    avg_c = jnp.sum(f, axis=1, keepdims=True) * (1.0 / HW)   # (C, 1)
    max_c = jnp.max(f, axis=1, keepdims=True)                # (C, 1)
    z = jnp.concatenate([avg_c, max_c], axis=1)              # (C, 2)

    # Shared MLP bottleneck applied to both pooled vectors in one matmul pair.
    h = jnp.maximum(
        jnp.dot(w1_ref[...], z, preferred_element_type=jnp.float32), 0.0)  # (Cm, 2)
    y = jnp.dot(w2_ref[...], h, preferred_element_type=jnp.float32)        # (C, 2)

    # avg-branch + max-branch  ==  sum over the 2 columns.
    att = jax.nn.sigmoid(jnp.sum(y, axis=1, keepdims=True))                # (C, 1)
    fp = f * att                                                           # (C, HW)

    # ---- Spatial attention: channel mean/max (sublane reduce) ----
    avg_map = jnp.sum(fp, axis=0, keepdims=True) * (1.0 / C)   # (1, HW)
    max_map = jnp.max(fp, axis=0, keepdims=True)                # (1, HW)
    maps = jnp.concatenate([avg_map, max_map], axis=1)          # (1, 2*HW)

    # 'same' conv(2 -> 1, k x k) expressed as ONE matmul with a precomputed
    # Toeplitz weight matrix (both input channels stacked along the rows).
    logit = jnp.dot(maps, kcat_ref[...], preferred_element_type=jnp.float32)  # (1, HW)
    spat = jax.nn.sigmoid(logit)                                # (1, HW)

    out_ref[0] = fp * spat                                      # lane-dense store (C, HW)


# ----------------------------------------------------------------------------- #
# Host-side weight preprocessing: conv kernel -> (H*W, H*W) matrix
# out_flat[p_out] = sum_{p_in} in_flat[p_in] * K[p_in, p_out]
# ----------------------------------------------------------------------------- #
def _conv_weight_to_matrix(w_kk, H, W):
    KH, KW = w_kk.shape
    ph, pw = (KH - 1) // 2, (KW - 1) // 2           # 'same' padding (odd kernel)
    hi = jnp.arange(H)
    wi = jnp.arange(W)
    h_in = hi[:, None, None, None]                  # (H,1,1,1)
    w_in = wi[None, :, None, None]                  # (1,W,1,1)
    h_out = hi[None, None, :, None]                 # (1,1,H,1)
    w_out = wi[None, None, None, :]                 # (1,1,1,W)
    dh = h_in - h_out + ph
    dw = w_in - w_out + pw
    valid = (dh >= 0) & (dh < KH) & (dw >= 0) & (dw < KW)
    vals = w_kk[jnp.clip(dh, 0, KH - 1), jnp.clip(dw, 0, KW - 1)]
    K = jnp.where(valid, vals, 0.0)                 # (H, W, H, W) = (in, in, out, out)
    return K.reshape(H * W, H * W).astype(jnp.float32)


# ----------------------------------------------------------------------------- #
# Forward wrapper
# ----------------------------------------------------------------------------- #
@jax.jit
def cbam_forward(x, params):
    # x: (N, C, H, W) float32
    N, C, H, W = x.shape
    HW = H * W
    w1 = params['w1']                               # (Cm, C)   (1x1 conv, no bias)
    w2 = params['w2']                               # (C, Cm)   (1x1 conv, no bias)
    sa = params['sa_w']                             # (1, 2, K, K) (no bias)
    Cm = w1.shape[0]

    k_avg = _conv_weight_to_matrix(sa[0, 0], H, W)  # (HW, HW)
    k_max = _conv_weight_to_matrix(sa[0, 1], H, W)  # (HW, HW)
    k_cat = jnp.concatenate([k_avg, k_max], axis=0)  # (2*HW, HW): [avg | max] rows

    xk = x.reshape(N, C, HW)                        # free: H,W are contiguous

    out = pl.pallas_call(
        cbam_kernel,
        out_shape=jax.ShapeDtypeStruct((N, C, HW), jnp.float32),
        grid=(N,),
        in_specs=[
            pl.BlockSpec((1, C, HW), lambda n: (n, 0, 0)),
            pl.BlockSpec((Cm, C), lambda n: (0, 0)),
            pl.BlockSpec((C, Cm), lambda n: (0, 0)),
            pl.BlockSpec((2 * HW, HW), lambda n: (0, 0)),
        ],
        out_specs=pl.BlockSpec((1, C, HW), lambda n: (n, 0, 0)),
        compiler_params=pltpu.CompilerParams(dimension_semantics=("parallel",)),
    )(xk, w1, w2, k_cat)

    return out.reshape(N, C, H, W)


# ----------------------------------------------------------------------------- #
# Plain-JAX reference (mirrors the PyTorch CBAM) for validation
# ----------------------------------------------------------------------------- #
def reference_forward(x, p):
    avg = jnp.mean(x, axis=(2, 3), keepdims=True)
    mx = jnp.max(x, axis=(2, 3), keepdims=True)

    def bottleneck(z):                              # z: (N, C, 1, 1)
        h = jax.nn.relu(jnp.einsum('mc,nchw->nmhw', p['w1'], z))
        return jnp.einsum('cm,nmhw->nchw', p['w2'], h)

    att = jax.nn.sigmoid(bottleneck(avg) + bottleneck(mx))
    fp = att * x
    am = jnp.mean(fp, axis=1, keepdims=True)
    mm = jnp.max(fp, axis=1, keepdims=True)
    sm = jnp.concatenate([am, mm], axis=1)          # (N, 2, H, W)
    sc = jax.lax.conv_general_dilated(
        sm, p['sa_w'], window_strides=(1, 1), padding='SAME',
        dimension_numbers=('NCHW', 'OIHW', 'NCHW'))
    return jax.nn.sigmoid(sc) * fp


# ----------------------------------------------------------------------------- #
# Deterministic synthetic parameters (shapes from CBAM.__init__)
# ----------------------------------------------------------------------------- #
def make_params(key, C, reduction_ratio, kernel_size):
    Cm = C // reduction_ratio
    k1, k2, k3 = jax.random.split(key, 3)

    def conv_w(k, shape):
        fan_in = math.prod(shape[1:])
        return jax.random.normal(k, shape, jnp.float32) / jnp.sqrt(float(fan_in))

    return {
        'w1': conv_w(k1, (Cm, C)),                  # Conv2d(C, Cm, 1, bias=False)
        'w2': conv_w(k2, (C, Cm)),                  # Conv2d(Cm, C, 1, bias=False)
        'sa_w': conv_w(k3, (1, 2, kernel_size, kernel_size)),  # Conv2d(2,1,k,'same')
    }


if __name__ == "__main__":
    key = jax.random.PRNGKey(0)
    N, C, H, W = 2, 16, 16, 16                      # small shapes, H*W = 256 (lane-dense)
    reduction_ratio, kernel_size = 4, 7
    pkey, xkey = jax.random.split(key)
    params = make_params(pkey, C, reduction_ratio, kernel_size)
    x = jax.random.normal(xkey, (N, C, H, W), dtype=jnp.float32)

    out = jax.block_until_ready(cbam_forward(x, params))
    ref = jax.block_until_ready(reference_forward(x, params))

    assert out.shape == (N, C, H, W), out.shape
    err = float(jnp.max(jnp.abs(out - ref)))
    assert err < 1e-3, f"max abs error {err}"
    print("KERNEL_OK")
</pallas_src>

<mosaic_0001>
module attributes {stable_mosaic.version = 11 : i64} {
  func.func @cbam_kernel(%arg0: i32, %arg1: memref<1x16x256xf32, #tpu.memory_space<vmem>>, %arg2: memref<4x16xf32, #tpu.memory_space<vmem>>, %arg3: memref<16x4xf32, #tpu.memory_space<vmem>>, %arg4: memref<512x256xf32, #tpu.memory_space<vmem>>, %arg5: memref<1x16x256xf32, #tpu.memory_space<vmem>>) attributes {dimension_semantics = [#tpu.dimension_semantics<parallel>], iteration_bounds = array<i64: 2>, scalar_prefetch = 0 : i64, scratch_operands = 0 : i64, tpu.core_type = #tpu.core_type<tc>, window_params = [{transform_indices = @transform_0, window_bounds = array<i64: 1, 16, 256>}, {pipeline_mode = #tpu.pipeline_mode<synchronous>, transform_indices = @transform_1, window_bounds = array<i64: 4, 16>}, {pipeline_mode = #tpu.pipeline_mode<synchronous>, transform_indices = @transform_2, window_bounds = array<i64: 16, 4>}, {pipeline_mode = #tpu.pipeline_mode<synchronous>, transform_indices = @transform_3, window_bounds = array<i64: 512, 256>}, {transform_indices = @transform_4, window_bounds = array<i64: 1, 16, 256>}]} {
    %c0 = arith.constant 0 : index
    %c0_0 = arith.constant 0 : index
    %c0_1 = arith.constant 0 : index
    %0 = vector.load %arg1[%c0, %c0_0, %c0_1] : memref<1x16x256xf32, #tpu.memory_space<vmem>>, vector<1x16x256xf32>
    %1 = vector.shape_cast %0 : vector<1x16x256xf32> to vector<16x256xf32>
    %cst = arith.constant dense<0.000000e+00> : vector<16xf32>
    %2 = vector.multi_reduction <add>, %1, %cst [1] : vector<16x256xf32> to vector<16xf32>
    %3 = vector.shape_cast %2 : vector<16xf32> to vector<16x1xf32>
    %cst_2 = arith.constant 3.906250e-03 : f32
    %4 = vector.broadcast %cst_2 : f32 to vector<16x1xf32>
    %5 = arith.mulf %3, %4 : vector<16x1xf32>
    %cst_3 = arith.constant dense<0xFF800000> : vector<16xf32>
    %6 = vector.multi_reduction <maximumf>, %1, %cst_3 [1] : vector<16x256xf32> to vector<16xf32>
    %7 = vector.shape_cast %6 : vector<16xf32> to vector<16x1xf32>
    %8 = tpu.concatenate %5, %7 in 1 : vector<16x1xf32>, vector<16x1xf32> -> vector<16x2xf32>
    %c0_4 = arith.constant 0 : index
    %c0_5 = arith.constant 0 : index
    %9 = vector.load %arg2[%c0_4, %c0_5] : memref<4x16xf32, #tpu.memory_space<vmem>>, vector<4x16xf32>
    %cst_6 = arith.constant dense<0.000000e+00> : vector<4x2xf32>
    %10 = tpu.matmul %9, %8, %cst_6 {dimension_numbers = #tpu.dot_dimension_numbers<[1], [0], [0], [1], [0, 0, 1, 1], [], []>} : vector<4x16xf32>, vector<16x2xf32>, vector<4x2xf32> -> vector<4x2xf32>
    %cst_7 = arith.constant 0.000000e+00 : f32
    %11 = vector.broadcast %cst_7 : f32 to vector<4x2xf32>
    %12 = arith.maximumf %10, %11 : vector<4x2xf32>
    %c0_8 = arith.constant 0 : index
    %c0_9 = arith.constant 0 : index
    %13 = vector.load %arg3[%c0_8, %c0_9] : memref<16x4xf32, #tpu.memory_space<vmem>>, vector<16x4xf32>
    %cst_10 = arith.constant dense<0.000000e+00> : vector<16x2xf32>
    %14 = tpu.matmul %13, %12, %cst_10 {dimension_numbers = #tpu.dot_dimension_numbers<[1], [0], [0], [1], [0, 0, 1, 1], [], []>} : vector<16x4xf32>, vector<4x2xf32>, vector<16x2xf32> -> vector<16x2xf32>
    %cst_11 = arith.constant dense<0.000000e+00> : vector<16xf32>
    %15 = vector.multi_reduction <add>, %14, %cst_11 [1] : vector<16x2xf32> to vector<16xf32>
    %16 = vector.shape_cast %15 : vector<16xf32> to vector<16x1xf32>
    %17 = arith.negf %16 : vector<16x1xf32>
    %18 = math.exp %17 : vector<16x1xf32>
    %cst_12 = arith.constant 1.000000e+00 : f32
    %19 = vector.broadcast %cst_12 : f32 to vector<16x1xf32>
    %20 = arith.addf %19, %18 : vector<16x1xf32>
    %21 = arith.divf %19, %20 : vector<16x1xf32>
    %22 = vector.broadcast %21 : vector<16x1xf32> to vector<16x256xf32>
    %23 = arith.mulf %1, %22 : vector<16x256xf32>
    %cst_13 = arith.constant dense<0.000000e+00> : vector<256xf32>
    %24 = vector.multi_reduction <add>, %23, %cst_13 [0] : vector<16x256xf32> to vector<256xf32>
    %25 = vector.shape_cast %24 : vector<256xf32> to vector<1x256xf32>
    %cst_14 = arith.constant 6.250000e-02 : f32
    %26 = vector.broadcast %cst_14 : f32 to vector<1x256xf32>
    %27 = arith.mulf %25, %26 : vector<1x256xf32>
    %cst_15 = arith.constant dense<0xFF800000> : vector<256xf32>
    %28 = vector.multi_reduction <maximumf>, %23, %cst_15 [0] : vector<16x256xf32> to vector<256xf32>
    %29 = vector.shape_cast %28 : vector<256xf32> to vector<1x256xf32>
    %30 = tpu.concatenate %27, %29 in 1 : vector<1x256xf32>, vector<1x256xf32> -> vector<1x512xf32>
    %c0_16 = arith.constant 0 : index
    %c0_17 = arith.constant 0 : index
    %31 = vector.load %arg4[%c0_16, %c0_17] : memref<512x256xf32, #tpu.memory_space<vmem>>, vector<512x256xf32>
    %cst_18 = arith.constant dense<0.000000e+00> : vector<1x256xf32>
    %32 = tpu.matmul %30, %31, %cst_18 {dimension_numbers = #tpu.dot_dimension_numbers<[1], [0], [0], [1], [0, 0, 1, 1], [], []>} : vector<1x512xf32>, vector<512x256xf32>, vector<1x256xf32> -> vector<1x256xf32>
    %33 = arith.negf %32 : vector<1x256xf32>
    %34 = math.exp %33 : vector<1x256xf32>
    %cst_19 = arith.constant 1.000000e+00 : f32
    %35 = vector.broadcast %cst_19 : f32 to vector<1x256xf32>
    %36 = arith.addf %35, %34 : vector<1x256xf32>
    %37 = arith.divf %35, %36 : vector<1x256xf32>
    %38 = vector.broadcast %37 : vector<1x256xf32> to vector<16x256xf32>
    %39 = arith.mulf %23, %38 : vector<16x256xf32>
    %c0_20 = arith.constant 0 : index
    %c0_21 = arith.constant 0 : index
    %c0_22 = arith.constant 0 : index
    %40 = vector.load %arg5[%c0_20, %c0_21, %c0_22] : memref<1x16x256xf32, #tpu.memory_space<vmem>>, vector<1x16x256xf32>
    %41 = vector.shape_cast %40 : vector<1x16x256xf32> to vector<16x256xf32>
    %42 = vector.shape_cast %39 : vector<16x256xf32> to vector<1x16x256xf32>
    tpu.vector_store %arg5[%c0_20, %c0_21, %c0_22], %42 {strides = array<i32>} : memref<1x16x256xf32, #tpu.memory_space<vmem>>, vector<1x16x256xf32>,
    return
  }
  func.func @transform_0(%arg0: i32) -> (i32, i32, i32) {
    %c0_i32 = arith.constant 0 : i32
    %c0_i32_0 = arith.constant 0 : i32
    %c0_i32_1 = arith.constant 0 : i32
    return %arg0, %c0_i32, %c0_i32_0 : i32, i32, i32
  }
  func.func @transform_1(%arg0: i32) -> (i32, i32) {
    %c0_i32 = arith.constant 0 : i32
    %c0_i32_0 = arith.constant 0 : i32
    %c0_i32_1 = arith.constant 0 : i32
    return %c0_i32, %c0_i32_0 : i32, i32
  }
  func.func @transform_2(%arg0: i32) -> (i32, i32) {
    %c0_i32 = arith.constant 0 : i32
    %c0_i32_0 = arith.constant 0 : i32
    %c0_i32_1 = arith.constant 0 : i32
    return %c0_i32, %c0_i32_0 : i32, i32
  }
  func.func @transform_3(%arg0: i32) -> (i32, i32) {
    %c0_i32 = arith.constant 0 : i32
    %c0_i32_0 = arith.constant 0 : i32
    %c0_i32_1 = arith.constant 0 : i32
    return %c0_i32, %c0_i32_0 : i32, i32
  }
  func.func @transform_4(%arg0: i32) -> (i32, i32, i32) {
    %c0_i32 = arith.constant 0 : i32
    %c0_i32_0 = arith.constant 0 : i32
    %c0_i32_1 = arith.constant 0 : i32
    return %arg0, %c0_i32, %c0_i32_0 : i32, i32, i32
  }
}

</mosaic_0001>

<llo_original>
// kernel: cbam_forward.1
$region0: #{cbam_forward.1}
  #allocation0 [shape = 'u32[]', space=smem, size = 0x4, offset = 0x4, fixed_abs, tag = 'smem constant byte address 0x4 - core index']
  #allocation1 [shape = 'u32[144,128]{1,0:T(1,128)}', space=vmem, size = 0x12000, scoped, tag = 'internal scratch']
  %s0 = inlined_call_operand.vmem [shape: f32[2,16,256], index: 0, kind: input, shape index: {}]
  %s1 = inlined_call_operand.vmem [shape: f32[4,16], index: 1, kind: input, shape index: {}]
  %s2 = inlined_call_operand.vmem [shape: f32[16,4], index: 2, kind: input, shape index: {}]
  %s3 = inlined_call_operand.vmem [shape: f32[512,256], index: 3, kind: input, shape index: {}]
  %s4 = inlined_call_operand.vmem [shape: f32[2,16,256], index: 4, kind: output, shape index: {}]
  %s5 = sld [smem:[#allocation0]]
  $region49: #{cbam_forward.1} parent=0
    _
  %s7 = ssub.s32 1, %s5
  %s8 = scalar_select 0, %s7, %s5
  loop: start=0, step=1, limit=4
  $region2: #{cbam_forward.1} parent=0 // loop_pre_header
    _
  $region3: #{cbam_forward.1} parent=0 // loop_header
    %s10 = sphi 0, %s14
    %p11 = scmp.ge.s32.totalorder %s10, 4
    %s20 = sphi 0, %s22
    %s23 = sphi 0, %s20
    %s24 = sphi 0, %s23
    %s40 = sphi 0, %s24
    %s44 = sphi 0, %s44
    %s46 = sphi 0, %s44
    %s47 = sphi 0, %s46
    %s61 = sphi 0, %s47
    %s65 = sphi 0, %s65
    %s67 = sphi 0, %s65
    %s68 = sphi 0, %s67
    %s82 = sphi 0, %s68
    %s86 = sphi 0, %s86
    %s88 = sphi 0, %s86
    %s89 = sphi 0, %s88
    %s103 = sphi 0, %s89
    %s109 = sphi 0, %s111
    %s112 = sphi 0, %s109
    %s113 = sphi 0, %s112
    %s129 = sphi 0, %s113
  $region4: #{cbam_forward.1} parent=0 // loop_header_branch
    %13 = sbr.rel (%p11) target = $region8
  $region5: #{cbam_forward.1} parent=0 // loop_body
    %s15 = ssub.s32 %s10, 1
    %s16 = ssub.s32 %s10, 2
    %s17 = sadd.s32 %s10, 1
    %s18 = ssub.s32 %s10, %s17
    %p19 = scmp.eq.s32.totalorder %s18, 0
    %s21 = sadd.s32 %s20, 1
    %s22 = scalar_select %p19, %s20, %s21
    %p25 = pneg %p19
    %p26 = scmp.eq.s32.totalorder %s10, 1
    %p27 = por %p25, %p26
    %p28 = scmp.ne.s32.totalorder %s20, %s23
    %p29 = scmp.eq.s32.totalorder %s10, 0
    %p30 = por %p28, %p29
    %p31 = scmp.ne.s32.totalorder %s20, %s23
    %p32 = scmp.eq.s32.totalorder %s15, 1
    %p33 = por %p31, %p32
    %p34 = scmp.ne.s32.totalorder %s23, %s24
    %p35 = scmp.eq.s32.totalorder %s15, 0
    %p36 = por %p34, %p35
    %p37 = scmp.ne.s32.totalorder %s23, %s24
    %p38 = scmp.eq.s32.totalorder %s16, 1
    %p39 = por %p37, %p38
    %p41 = scmp.ne.s32.totalorder %s24, %s40
    %p42 = scmp.eq.s32.totalorder %s16, 0
    %p43 = por %p41, %p42
    %s45 = sadd.s32 %s44, 1
    %p48 = scmp.eq.s32.totalorder %s10, 1
    %p49 = scmp.ne.s32.totalorder %s44, %s46
    %p50 = scmp.eq.s32.totalorder %s10, 0
    %p51 = por %p49, %p50
    %p52 = scmp.ne.s32.totalorder %s44, %s46
    %p53 = scmp.eq.s32.totalorder %s15, 1
    %p54 = por %p52, %p53
    %p55 = scmp.ne.s32.totalorder %s46, %s47
    %p56 = scmp.eq.s32.totalorder %s15, 0
    %p57 = por %p55, %p56
    %p58 = scmp.ne.s32.totalorder %s46, %s47
    %p59 = scmp.eq.s32.totalorder %s16, 1
    %p60 = por %p58, %p59
    %p62 = scmp.ne.s32.totalorder %s47, %s61
    %p63 = scmp.eq.s32.totalorder %s16, 0
    %p64 = por %p62, %p63
    %s66 = sadd.s32 %s65, 1
    %p69 = scmp.eq.s32.totalorder %s10, 1
    %p70 = scmp.ne.s32.totalorder %s65, %s67
    %p71 = scmp.eq.s32.totalorder %s10, 0
    %p72 = por %p70, %p71
    %p73 = scmp.ne.s32.totalorder %s65, %s67
    %p74 = scmp.eq.s32.totalorder %s15, 1
    %p75 = por %p73, %p74
    %p76 = scmp.ne.s32.totalorder %s67, %s68
    %p77 = scmp.eq.s32.totalorder %s15, 0
    %p78 = por %p76, %p77
    %p79 = scmp.ne.s32.totalorder %s67, %s68
    %p80 = scmp.eq.s32.totalorder %s16, 1
    %p81 = por %p79, %p80
    %p83 = scmp.ne.s32.totalorder %s68, %s82
    %p84 = scmp.eq.s32.totalorder %s16, 0
    %p85 = por %p83, %p84
    %s87 = sadd.s32 %s86, 1
    %p90 = scmp.eq.s32.totalorder %s10, 1
    %p91 = scmp.ne.s32.totalorder %s86, %s88
    %p92 = scmp.eq.s32.totalorder %s10, 0
    %p93 = por %p91, %p92
    %p94 = scmp.ne.s32.totalorder %s86, %s88
    %p95 = scmp.eq.s32.totalorder %s15, 1
    %p96 = por %p94, %p95
    %p97 = scmp.ne.s32.totalorder %s88, %s89
    %p98 = scmp.eq.s32.totalorder %s15, 0
    %p99 = por %p97, %p98
    %p100 = scmp.ne.s32.totalorder %s88, %s89
    %p101 = scmp.eq.s32.totalorder %s16, 1
    %p102 = por %p100, %p101
    %p104 = scmp.ne.s32.totalorder %s89, %s103
    %p105 = scmp.eq.s32.totalorder %s16, 0
    %p106 = por %p104, %p105
    %s107 = ssub.s32 %s10, %s17
    %p108 = scmp.eq.s32.totalorder %s107, 0
    %s110 = sadd.s32 %s109, 1
    %s111 = scalar_select %p108, %s109, %s110
    %p114 = pneg %p108
    %p115 = scmp.eq.s32.totalorder %s10, 1
    %p116 = por %p114, %p115
    %p117 = scmp.ne.s32.totalorder %s109, %s112
    %p118 = scmp.eq.s32.totalorder %s10, 0
    %p119 = por %p117, %p118
    %p120 = scmp.ne.s32.totalorder %s109, %s112
    %p121 = scmp.eq.s32.totalorder %s15, 1
    %p122 = por %p120, %p121
    %p123 = scmp.ne.s32.totalorder %s112, %s113
    %p124 = scmp.eq.s32.totalorder %s15, 0
    %p125 = por %p123, %p124
    %p126 = scmp.ne.s32.totalorder %s112, %s113
    %p127 = scmp.eq.s32.totalorder %s16, 1
    %p128 = por %p126, %p127
    %p130 = scmp.ne.s32.totalorder %s113, %s129
    %p131 = scmp.eq.s32.totalorder %s16, 0
    %p132 = por %p130, %p131
    %p133 = scmp.le.s32.totalorder 1, %s10
    %p134 = scmp.lt.s32.totalorder %s10, 3
    %p135 = pnand %p133, %p134
    %p136 = pneg %p135
    // Predicated region
    $region9: #{cbam_forward.1} parent=5 // pred_check
      _
    $region10: #{cbam_forward.1} parent=5 // pred_check_branch
      %138 = sbr.rel (%p135) target = $region12
    $region11: #{cbam_forward.1} parent=5 // pred_region
      %s139 = ssub.s32 %s10, 1
      // Predicated region
      $region13: #{cbam_forward.1} parent=11 // pred_check
        %p140 = pneg %p57
      $region14: #{cbam_forward.1} parent=11 // pred_check_branch
        %142 = sbr.rel (%p140) target = $region16
      $region15: #{cbam_forward.1} parent=11 // pred_region
        _
      $region16: #{cbam_forward.1} parent=11 // pred_fallthru
        _
      // Predicated region
      $region17: #{cbam_forward.1} parent=11 // pred_check
        %p143 = pneg %p78
      $region18: #{cbam_forward.1} parent=11 // pred_check_branch
        %145 = sbr.rel (%p143) target = $region20
      $region19: #{cbam_forward.1} parent=11 // pred_region
        _
      $region20: #{cbam_forward.1} parent=11 // pred_fallthru
        _
      // Predicated region
      $region21: #{cbam_forward.1} parent=11 // pred_check
        %p146 = pneg %p99
      $region22: #{cbam_forward.1} parent=11 // pred_check_branch
        %148 = sbr.rel (%p146) target = $region24
      $region23: #{cbam_forward.1} parent=11 // pred_region
        _
      $region24: #{cbam_forward.1} parent=11 // pred_fallthru
        _
    $region12: #{cbam_forward.1} parent=5 // pred_fallthru
      _
    %p149 = scmp.lt.s32.totalorder %s10, 2
    // Predicated region
    $region25: #{cbam_forward.1} parent=5 // pred_check
      %p150 = pneg %p149
    $region26: #{cbam_forward.1} parent=5 // pred_check_branch
      %152 = sbr.rel (%p150) target = $region28
    $region27: #{cbam_forward.1} parent=5 // pred_region
      // Predicated region
      $region29: #{cbam_forward.1} parent=27 // pred_check
        %p153 = pneg %p30
      $region30: #{cbam_forward.1} parent=27 // pred_check_branch
        %155 = sbr.rel (%p153) target = $region32
      $region31: #{cbam_forward.1} parent=27 // pred_region
        %p156 = scmp.lt.s32.totalorder %s10, 1
        %s157 = scalar_select %p156, %s10, 1
        %s158 = smul.addr %s157, 4
        %s159 = smul.addr %s158, 8
        %s160 = scalar_lea.vmem %s0, %s159
      $region32: #{cbam_forward.1} parent=27 // pred_fallthru
        _
    $region28: #{cbam_forward.1} parent=5 // pred_fallthru
      _
    %p161 = scmp.le.s32.totalorder 1, %s10
    %p162 = scmp.lt.s32.totalorder %s10, 3
    %p163 = pnand %p161, %p162
    %p164 = pneg %p163
    // Predicated region
    $region33: #{cbam_forward.1} parent=5 // pred_check
      _
    $region34: #{cbam_forward.1} parent=5 // pred_check_branch
      %166 = sbr.rel (%p163) target = $region36
    $region35: #{cbam_forward.1} parent=5 // pred_region
      %s167 = ssub.s32 %s10, 1
      %p168 = scmp.lt.s32.totalorder %s15, 1
      %s169 = scalar_select %p168, %s15, 1
      %s170 = smul.addr %s169, 4
      %s171 = smul.addr %s170, 8
      %s172 = scalar_lea.vmem %s0, %s171
      %p173 = pneg %p36
      %p174 = pneg %p33
      %p175 = pneg %p57
      %p176 = pneg %p54
      %p177 = pneg %p78
      %p178 = pneg %p75
      %p179 = pneg %p99
      %p180 = pneg %p96
      %p181 = pneg %p125
      %p182 = pneg %p122
      %p183 = scmp.lt.s32.totalorder %s15, 1
      %s184 = scalar_select %p183, %s15, 1
      %s185 = smul.addr %s184, 4
      %s186 = smul.addr %s185, 8
      %s187 = scalar_lea.vmem %s4, %s186
      %p188 = scmp.lt.s32.totalorder %s15, 1
      %s189 = scalar_select %p188, %s15, 1
      %s190 = smul.addr %s189, 4
      %s191 = smul.addr %s190, 8
      %s192 = scalar_lea.vmem %s0, %s191
      %p193 = scmp.lt.s32.totalorder %s15, 1
      %s194 = scalar_select %p193, %s15, 1
      %s195 = smul.addr %s194, 4
      %s196 = smul.addr %s195, 8
      %s197 = scalar_lea.vmem %s4, %s196
      %v198 = vld [vmem:[%s192] sm:$0xff]
      %v199 = vld [vmem:[%s192 + $0x8] sm:$0xff]
      %v200 = vld [vmem:[%s192 + $0x10] sm:$0xff]
      %v201 = vld [vmem:[%s192 + $0x18] sm:$0xff]
      %v202 = vadd.f32 %v198, %v199
      %203 = vadd.xlane.f32.xlu0 %v202
      %v204 = vpop.xlane.xlu0 %203
      %v205 = vadd.f32 %v200, %v201
      %206 = vadd.xlane.f32.xlu0 %v205
      %v207 = vpop.xlane.xlu0 %206
      %v208 = vmul.f32 %v204, 0.00390625
      %v209 = vmul.f32 %v207, 0.00390625
      %v210 = vmax.f32 %v198, %v199
      %211 = vmax.xlane.f32.xlu0 %v210
      %v212 = vpop.xlane.xlu0 %211
      %v213 = vmax.f32 %v200, %v201
      %214 = vmax.xlane.f32.xlu0 %v213
      %v215 = vpop.xlane.xlu0 %214
      %vm216 = vcmask 7168
      %v217 = vsel %vm216, %v208, %v212
      %v218 = vsel %vm216, %v209, %v215
      %v219 = vld [vmem:[%s1] sm:$0xf]
      %vm220 = vcmask 130048
      %v222 = vsel %vm220, %v219, 0
      %224 = vmatprep.subr.mxu0 0.0
      %225 = vmatpush1.msra.mxu0 %v217
      %226 = vmatprep.subr.mxu0 0.0
      %227 = vmatpush1.msra.mxu0 %v218
      %228 = vmatprep.subr.mxu0 0.0
      %229 = vmatpush1.msra.mxu0 0.0
      %230 = vmatprep.subr.mxu0 0.0
      %231 = vmatpush1.msra.mxu0 0.0
      %232 = vmatprep.subr.mxu0 0.0
      %233 = vmatpush1.msra.mxu0 0.0
      %234 = vmatprep.subr.mxu0 0.0
      %235 = vmatpush1.msra.mxu0 0.0
      %236 = vmatprep.subr.mxu0 0.0
      %237 = vmatpush1.msra.mxu0 0.0
      %238 = vmatprep.subr.mxu0 0.0
      %239 = vmatpush1.msra.mxu0 0.0
      %240 = vmatprep.subr.mxu0 0.0
      %241 = vmatpush1.msra.mxu0 0.0
      %242 = vmatprep.subr.mxu0 0.0
      %243 = vmatpush1.msra.mxu0 0.0
      %244 = vmatprep.subr.mxu0 0.0
      %245 = vmatpush1.msra.mxu0 0.0
      %246 = vmatprep.subr.mxu0 0.0
      %247 = vmatpush1.msra.mxu0 0.0
      %248 = vmatprep.subr.mxu0 0.0
      %249 = vmatpush1.msra.mxu0 0.0
      %250 = vmatprep.subr.mxu0 0.0
      %251 = vmatpush1.msra.mxu0 0.0
      %252 = vmatprep.subr.mxu0 0.0
      %253 = vmatpush1.msra.mxu0 0.0
      %254 = vmatprep.subr.mxu0 0.0
      %255 = vmatpush1.msra.mxu0 0.0
      %256 = vmatprep.subr.mxu0 0.0
      %257 = vmatpush1.msra.mxu0 0.0
      %258 = vmatprep.subr.mxu0 0.0
      %259 = vmatpush1.msra.mxu0 0.0
      %260 = vmatprep.subr.mxu0 0.0
      %261 = vmatpush1.msra.mxu0 0.0
      %262 = vmatprep.subr.mxu0 0.0
      %263 = vmatpush1.msra.mxu0 0.0
      %264 = vmatprep.subr.mxu0 0.0
      %265 = vmatpush1.msra.mxu0 0.0
      %266 = vmatprep.subr.mxu0 0.0
      %267 = vmatpush1.msra.mxu0 0.0
      %268 = vmatprep.subr.mxu0 0.0
      %269 = vmatpush1.msra.mxu0 0.0
      %270 = vmatprep.subr.mxu0 0.0
      %271 = vmatpush1.msra.mxu0 0.0
      %272 = vmatprep.subr.mxu0 0.0
      %273 = vmatpush1.msra.mxu0 0.0
      %274 = vmatprep.subr.mxu0 0.0
      %275 = vmatpush1.msra.mxu0 0.0
      %276 = vmatprep.subr.mxu0 0.0
      %277 = vmatpush1.msra.mxu0 0.0
      %278 = vmatprep.subr.mxu0 0.0
      %279 = vmatpush1.msra.mxu0 0.0
      %280 = vmatprep.subr.mxu0 0.0
      %281 = vmatpush1.msra.mxu0 0.0
      %282 = vmatprep.subr.mxu0 0.0
      %283 = vmatpush1.msra.mxu0 0.0
      %284 = vmatprep.subr.mxu0 0.0
      %285 = vmatpush1.msra.mxu0 0.0
      %286 = vmatprep.subr.mxu0 0.0
      %287 = vmatpush1.msra.mxu0 0.0
      %288 = vmatprep.mubr.f32.mxu0 0.0
      %289 = vmatmul.mubr.f32.gmra.mrb[0].mxu0 %v222
      %v290 = vpop.f32.mrb[0].mxu0
      %v291 = vadd.f32 0.0, %v290
      %v292 = vpop.f32.mrb[0].mxu0
      %293 = vdwg.mxu0
      %v294 = vmax.f32 %v291, 0.0
      %v295 = vld [vmem:[%s2] sm:$0xff]
      %v296 = vld [vmem:[%s2 + $0x8] sm:$0xff]
      %vm297 = vcmask 31744
      %v299 = vsel %vm297, %v295, 0
      %v302 = vsel %vm297, %v296, 0
      %vm304 = vcmask 1043456
      %v306 = vsel %vm304, %v294, 0
      %308 = vmatprep.subr.mxu0 0.0
      %309 = vmatpush1.msra.mxu0 %v306
      %310 = vmatprep.subr.mxu0 0.0
      %311 = vmatpush1.msra.mxu0 0.0
      %312 = vmatprep.subr.mxu0 0.0
      %313 = vmatpush1.msra.mxu0 0.0
      %314 = vmatprep.subr.mxu0 0.0
      %315 = vmatpush1.msra.mxu0 0.0
      %316 = vmatprep.subr.mxu0 0.0
      %317 = vmatpush1.msra.mxu0 0.0
      %318 = vmatprep.subr.mxu0 0.0
      %319 = vmatpush1.msra.mxu0 0.0
      %320 = vmatprep.subr.mxu0 0.0
      %321 = vmatpush1.msra.mxu0 0.0
      %322 = vmatprep.subr.mxu0 0.0
      %323 = vmatpush1.msra.mxu0 0.0
      %324 = vmatprep.subr.mxu0 0.0
      %325 = vmatpush1.msra.mxu0 0.0
      %326 = vmatprep.subr.mxu0 0.0
      %327 = vmatpush1.msra.mxu0 0.0
      %328 = vmatprep.subr.mxu0 0.0
      %329 = vmatpush1.msra.mxu0 0.0
      %330 = vmatprep.subr.mxu0 0.0
      %331 = vmatpush1.msra.mxu0 0.0
      %332 = vmatprep.subr.mxu0 0.0
      %333 = vmatpush1.msra.mxu0 0.0
      %334 = vmatprep.subr.mxu0 0.0
      %335 = vmatpush1.msra.mxu0 0.0
      %336 = vmatprep.subr.mxu0 0.0
      %337 = vmatpush1.msra.mxu0 0.0
      %338 = vmatprep.subr.mxu0 0.0
      %339 = vmatpush1.msra.mxu0 0.0
      %340 = vmatprep.subr.mxu0 0.0
      %341 = vmatpush1.msra.mxu0 0.0
      %342 = vmatprep.subr.mxu0 0.0
      %343 = vmatpush1.msra.mxu0 0.0
      %344 = vmatprep.subr.mxu0 0.0
      %345 = vmatpush1.msra.mxu0 0.0
      %346 = vmatprep.subr.mxu0 0.0
      %347 = vmatpush1.msra.mxu0 0.0
      %348 = vmatprep.subr.mxu0 0.0
      %349 = vmatpush1.msra.mxu0 0.0
      %350 = vmatprep.subr.mxu0 0.0
      %351 = vmatpush1.msra.mxu0 0.0
      %352 = vmatprep.subr.mxu0 0.0
      %353 = vmatpush1.msra.mxu0 0.0
      %354 = vmatprep.subr.mxu0 0.0
      %355 = vmatpush1.msra.mxu0 0.0
      %356 = vmatprep.subr.mxu0 0.0
      %357 = vmatpush1.msra.mxu0 0.0
      %358 = vmatprep.subr.mxu0 0.0
      %359 = vmatpush1.msra.mxu0 0.0
      %360 = vmatprep.subr.mxu0 0.0
      %361 = vmatpush1.msra.mxu0 0.0
      %362 = vmatprep.subr.mxu0 0.0
      %363 = vmatpush1.msra.mxu0 0.0
      %364 = vmatprep.subr.mxu0 0.0
      %365 = vmatpush1.msra.mxu0 0.0
      %366 = vmatprep.subr.mxu0 0.0
      %367 = vmatpush1.msra.mxu0 0.0
      %368 = vmatprep.subr.mxu0 0.0
      %369 = vmatpush1.msra.mxu0 0.0
      %370 = vmatprep.subr.mxu0 0.0
      %371 = vmatpush1.msra.mxu0 0.0
      %372 = vmatprep.mubr.f32.mxu0 0.0
      %373 = vmatmul.mubr.f32.gmra.mrb[0].mxu0 %v299
      %v374 = vpop.f32.mrb[0].mxu0
      %v375 = vadd.f32 0.0, %v374
      %v376 = vpop.f32.mrb[0].mxu0
      %377 = vmatprep.mubr.f32.mxu0 0.0
      %378 = vmatmul.mubr.f32.gmra.mrb[0].mxu0 %v302
      %v379 = vpop.f32.mrb[0].mxu0
      %v380 = vadd.f32 0.0, %v379
      %v381 = vpop.f32.mrb[0].mxu0
      %382 = vdwg.mxu0
      %vm383 = vcmask 15360
      %v384 = vsel %vm383, %v375, 0.0
      %385 = vadd.xlane.f32.xlu0 %v384
      %v386 = vpop.xlane.xlu0 %385
      %v387 = vsel %vm383, %v380, 0.0
      %388 = vadd.xlane.f32.xlu0 %v387
      %v389 = vpop.xlane.xlu0 %388
      %v390 = vxor.u32 %v386, 2147483648
      %v391 = vxor.u32 %v389, 2147483648
      %v392 = vmul.f32 %v390, 1.442695
      %v393 = vpow.pop %v392
      %v394 = vmul.f32 %v391, 1.442695
      %v395 = vpow.pop %v394
      %v396 = vadd.f32 %v393, 1.0
      %v397 = vadd.f32 %v395, 1.0
      %v398 = vrcp.pop %v396
      %v399 = vmul.f32 1.0, %v398
      %v400 = vrcp.pop %v397
      %v401 = vmul.f32 1.0, %v400
      %v402 = vmul.f32 %v198, %v399
      %v403 = vmul.f32 %v199, %v399
      %v404 = vmul.f32 %v200, %v401
      %v405 = vmul.f32 %v201, %v401
      %v406 = vadd.f32 %v402, %v404
      %v407 = vrot.slane %v406, 4
      %v408 = vadd.f32 %v406, %v407
      %v409 = vrot.slane %v408, 2
      %v410 = vadd.f32 %v408, %v409
      %v411 = vrot.slane %v410, 1
      %v412 = vadd.f32 %v410, %v411
      %v413 = vadd.f32 %v403, %v405
      %v414 = vrot.slane %v413, 4
      %v415 = vadd.f32 %v413, %v414
      %v416 = vrot.slane %v415, 2
      %v417 = vadd.f32 %v415, %v416
      %v418 = vrot.slane %v417, 1
      %v419 = vadd.f32 %v417, %v418
      %v420 = vmul.f32 %v412, 0.0625
      %v421 = vmul.f32 %v419, 0.0625
      %v422 = vmax.f32 %v402, %v404
      %v423 = vrot.slane %v422, 4
      %v424 = vmax.f32 %v422, %v423
      %v425 = vrot.slane %v424, 2
      %v426 = vmax.f32 %v424, %v425
      %v427 = vrot.slane %v426, 1
      %v428 = vmax.f32 %v426, %v427
      %v429 = vmax.f32 %v403, %v405
      %v430 = vrot.slane %v429, 4
      %v431 = vmax.f32 %v429, %v430
      %v432 = vrot.slane %v431, 2
      %v433 = vmax.f32 %v431, %v432
      %v434 = vrot.slane %v433, 1
      %v435 = vmax.f32 %v433, %v434
      %v436 = vld [vmem:[%s3] sm:$0xff]
      %v437 = vld [vmem:[%s3 + $0x8] sm:$0xff]
      %v438 = vld [vmem:[%s3 + $0x10] sm:$0xff]
      %v439 = vld [vmem:[%s3 + $0x18] sm:$0xff]
      %v440 = vld [vmem:[%s3 + $0x20] sm:$0xff]
      %v441 = vld [vmem:[%s3 + $0x28] sm:$0xff]
      %v442 = vld [vmem:[%s3 + $0x30] sm:$0xff]
      %v443 = vld [vmem:[%s3 + $0x38] sm:$0xff]
      %v444 = vld [vmem:[%s3 + $0x40] sm:$0xff]
      %v445 = vld [vmem:[%s3 + $0x48] sm:$0xff]
      %v446 = vld [vmem:[%s3 + $0x50] sm:$0xff]
      %v447 = vld [vmem:[%s3 + $0x58] sm:$0xff]
      %v448 = vld [vmem:[%s3 + $0x60] sm:$0xff]
      %v449 = vld [vmem:[%s3 + $0x68] sm:$0xff]
      %v450 = vld [vmem:[%s3 + $0x70] sm:$0xff]
      %v451 = vld [vmem:[%s3 + $0x78] sm:$0xff]
      %v452 = vld [vmem:[%s3 + $0x80] sm:$0xff]
      %v453 = vld [vmem:[%s3 + $0x88] sm:$0xff]
      %v454 = vld [vmem:[%s3 + $0x90] sm:$0xff]
      %v455 = vld [vmem:[%s3 + $0x98] sm:$0xff]
      %v456 = vld [vmem:[%s3 + $0xa0] sm:$0xff]
      %v457 = vld [vmem:[%s3 + $0xa8] sm:$0xff]
      %v458 = vld [vmem:[%s3 + $0xb0] sm:$0xff]
      %v459 = vld [vmem:[%s3 + $0xb8] sm:$0xff]
      %v460 = vld [vmem:[%s3 + $0xc0] sm:$0xff]
      %v461 = vld [vmem:[%s3 + $0xc8] sm:$0xff]
      %v462 = vld [vmem:[%s3 + $0xd0] sm:$0xff]
      %v463 = vld [vmem:[%s3 + $0xd8] sm:$0xff]
      %v464 = vld [vmem:[%s3 + $0xe0] sm:$0xff]
      %v465 = vld [vmem:[%s3 + $0xe8] sm:$0xff]
      %v466 = vld [vmem:[%s3 + $0xf0] sm:$0xff]
      %v467 = vld [vmem:[%s3 + $0xf8] sm:$0xff]
      %v468 = vld [vmem:[%s3 + $0x100] sm:$0xff]
      %v469 = vld [vmem:[%s3 + $0x108] sm:$0xff]
      %v470 = vld [vmem:[%s3 + $0x110] sm:$0xff]
      %v471 = vld [vmem:[%s3 + $0x118] sm:$0xff]
      %v472 = vld [vmem:[%s3 + $0x120] sm:$0xff]
      %v473 = vld [vmem:[%s3 + $0x128] sm:$0xff]
      %v474 = vld [vmem:[%s3 + $0x130] sm:$0xff]
      %v475 = vld [vmem:[%s3 + $0x138] sm:$0xff]
      %v476 = vld [vmem:[%s3 + $0x140] sm:$0xff]
      %v477 = vld [vmem:[%s3 + $0x148] sm:$0xff]
      %v478 = vld [vmem:[%s3 + $0x150] sm:$0xff]
      %v479 = vld [vmem:[%s3 + $0x158] sm:$0xff]
      %v480 = vld [vmem:[%s3 + $0x160] sm:$0xff]
      %v481 = vld [vmem:[%s3 + $0x168] sm:$0xff]
      %v482 = vld [vmem:[%s3 + $0x170] sm:$0xff]
      %v483 = vld [vmem:[%s3 + $0x178] sm:$0xff]
      %v484 = vld [vmem:[%s3 + $0x180] sm:$0xff]
      %v485 = vld [vmem:[%s3 + $0x188] sm:$0xff]
      %v486 = vld [vmem:[%s3 + $0x190] sm:$0xff]
      %v487 = vld [vmem:[%s3 + $0x198] sm:$0xff]
      %v488 = vld [vmem:[%s3 + $0x1a0] sm:$0xff]
      %v489 = vld [vmem:[%s3 + $0x1a8] sm:$0xff]
      %v490 = vld [vmem:[%s3 + $0x1b0] sm:$0xff]
      %v491 = vld [vmem:[%s3 + $0x1b8] sm:$0xff]
      %v492 = vld [vmem:[%s3 + $0x1c0] sm:$0xff]
      %v493 = vld [vmem:[%s3 + $0x1c8] sm:$0xff]
      %v494 = vld [vmem:[%s3 + $0x1d0] sm:$0xff]
      %v495 = vld [vmem:[%s3 + $0x1d8] sm:$0xff]
      %v496 = vld [vmem:[%s3 + $0x1e0] sm:$0xff]
      %v497 = vld [vmem:[%s3 + $0x1e8] sm:$0xff]
      %v498 = vld [vmem:[%s3 + $0x1f0] sm:$0xff]
      %v499 = vld [vmem:[%s3 + $0x1f8] sm:$0xff]
      %v500 = vld [vmem:[%s3 + $0x200] sm:$0xff]
      %v501 = vld [vmem:[%s3 + $0x208] sm:$0xff]
      %v502 = vld [vmem:[%s3 + $0x210] sm:$0xff]
      %v503 = vld [vmem:[%s3 + $0x218] sm:$0xff]
      %v504 = vld [vmem:[%s3 + $0x220] sm:$0xff]
      %v505 = vld [vmem:[%s3 + $0x228] sm:$0xff]
      %v506 = vld [vmem:[%s3 + $0x230] sm:$0xff]
      %v507 = vld [vmem:[%s3 + $0x238] sm:$0xff]
      %v508 = vld [vmem:[%s3 + $0x240] sm:$0xff]
      %v509 = vld [vmem:[%s3 + $0x248] sm:$0xff]
      %v510 = vld [vmem:[%s3 + $0x250] sm:$0xff]
      %v511 = vld [vmem:[%s3 + $0x258] sm:$0xff]
      %v512 = vld [vmem:[%s3 + $0x260] sm:$0xff]
      %v513 = vld [vmem:[%s3 + $0x268] sm:$0xff]
      %v514 = vld [vmem:[%s3 + $0x270] sm:$0xff]
      %v515 = vld [vmem:[%s3 + $0x278] sm:$0xff]
      %v516 = vld [vmem:[%s3 + $0x280] sm:$0xff]
      %v517 = vld [vmem:[%s3 + $0x288] sm:$0xff]
      %v518 = vld [vmem:[%s3 + $0x290] sm:$0xff]
      %v519 = vld [vmem:[%s3 + $0x298] sm:$0xff]
      %v520 = vld [vmem:[%s3 + $0x2a0] sm:$0xff]
      %v521 = vld [vmem:[%s3 + $0x2a8] sm:$0xff]
      %v522 = vld [vmem:[%s3 + $0x2b0] sm:$0xff]
      %v523 = vld [vmem:[%s3 + $0x2b8] sm:$0xff]
      %v524 = vld [vmem:[%s3 + $0x2c0] sm:$0xff]
      %v525 = vld [vmem:[%s3 + $0x2c8] sm:$0xff]
      %v526 = vld [vmem:[%s3 + $0x2d0] sm:$0xff]
      %v527 = vld [vmem:[%s3 + $0x2d8] sm:$0xff]
      %v528 = vld [vmem:[%s3 + $0x2e0] sm:$0xff]
      %v529 = vld [vmem:[%s3 + $0x2e8] sm:$0xff]
      %v530 = vld [vmem:[%s3 + $0x2f0] sm:$0xff]
      %v531 = vld [vmem:[%s3 + $0x2f8] sm:$0xff]
      %v532 = vld [vmem:[%s3 + $0x300] sm:$0xff]
      %v533 = vld [vmem:[%s3 + $0x308] sm:$0xff]
      %v534 = vld [vmem:[%s3 + $0x310] sm:$0xff]
      %v535 = vld [vmem:[%s3 + $0x318] sm:$0xff]
      %v536 = vld [vmem:[%s3 + $0x320] sm:$0xff]
      %v537 = vld [vmem:[%s3 + $0x328] sm:$0xff]
      %v538 = vld [vmem:[%s3 + $0x330] sm:$0xff]
      %v539 = vld [vmem:[%s3 + $0x338] sm:$0xff]
      %v540 = vld [vmem:[%s3 + $0x340] sm:$0xff]
      %v541 = vld [vmem:[%s3 + $0x348] sm:$0xff]
      %v542 = vld [vmem:[%s3 + $0x350] sm:$0xff]
      %v543 = vld [vmem:[%s3 + $0x358] sm:$0xff]
      %v544 = vld [vmem:[%s3 + $0x360] sm:$0xff]
      %v545 = vld [vmem:[%s3 + $0x368] sm:$0xff]
      %v546 = vld [vmem:[%s3 + $0x370] sm:$0xff]
      %v547 = vld [vmem:[%s3 + $0x378] sm:$0xff]
      %v548 = vld [vmem:[%s3 + $0x380] sm:$0xff]
      %v549 = vld [vmem:[%s3 + $0x388] sm:$0xff]
      %v550 = vld [vmem:[%s3 + $0x390] sm:$0xff]
      %v551 = vld [vmem:[%s3 + $0x398] sm:$0xff]
      %v552 = vld [vmem:[%s3 + $0x3a0] sm:$0xff]
      %v553 = vld [vmem:[%s3 + $0x3a8] sm:$0xff]
      %v554 = vld [vmem:[%s3 + $0x3b0] sm:$0xff]
      %v555 = vld [vmem:[%s3 + $0x3b8] sm:$0xff]
      %v556 = vld [vmem:[%s3 + $0x3c0] sm:$0xff]
      %v557 = vld [vmem:[%s3 + $0x3c8] sm:$0xff]
      %v558 = vld [vmem:[%s3 + $0x3d0] sm:$0xff]
      %v559 = vld [vmem:[%s3 + $0x3d8] sm:$0xff]
      %v560 = vld [vmem:[%s3 + $0x3e0] sm:$0xff]
      %v561 = vld [vmem:[%s3 + $0x3e8] sm:$0xff]
      %v562 = vld [vmem:[%s3 + $0x3f0] sm:$0xff]
      %v563 = vld [vmem:[%s3 + $0x3f8] sm:$0xff]
      %564 = vmatprep.subr.mxu0 %v437
      %565 = vmatpush1.msra.mxu0 %v436
      %566 = vmatprep.subr.mxu0 %v439
      %567 = vmatpush1.msra.mxu0 %v438
      %568 = vmatprep.subr.mxu0 %v441
      %569 = vmatpush1.msra.mxu0 %v440
      %570 = vmatprep.subr.mxu0 %v443
      %571 = vmatpush1.msra.mxu0 %v442
      %572 = vmatprep.subr.mxu0 %v445
      %573 = vmatpush1.msra.mxu0 %v444
      %574 = vmatprep.subr.mxu0 %v447
      %575 = vmatpush1.msra.mxu0 %v446
      %576 = vmatprep.subr.mxu0 %v449
      %577 = vmatpush1.msra.mxu0 %v448
      %578 = vmatprep.subr.mxu0 %v451
      %579 = vmatpush1.msra.mxu0 %v450
      %580 = vmatprep.subr.mxu0 %v453
      %581 = vmatpush1.msra.mxu0 %v452
      %582 = vmatprep.subr.mxu0 %v455
      %583 = vmatpush1.msra.mxu0 %v454
      %584 = vmatprep.subr.mxu0 %v457
      %585 = vmatpush1.msra.mxu0 %v456
      %586 = vmatprep.subr.mxu0 %v459
      %587 = vmatpush1.msra.mxu0 %v458
      %588 = vmatprep.subr.mxu0 %v461
      %589 = vmatpush1.msra.mxu0 %v460
      %590 = vmatprep.subr.mxu0 %v463
      %591 = vmatpush1.msra.mxu0 %v462
      %592 = vmatprep.subr.mxu0 %v465
      %593 = vmatpush1.msra.mxu0 %v464
      %594 = vmatprep.subr.mxu0 %v467
      %595 = vmatpush1.msra.mxu0 %v466
      %596 = vmatprep.subr.mxu0 %v469
      %597 = vmatpush1.msra.mxu0 %v468
      %598 = vmatprep.subr.mxu0 %v471
      %599 = vmatpush1.msra.mxu0 %v470
      %600 = vmatprep.subr.mxu0 %v473
      %601 = vmatpush1.msra.mxu0 %v472
      %602 = vmatprep.subr.mxu0 %v475
      %603 = vmatpush1.msra.mxu0 %v474
      %604 = vmatprep.subr.mxu0 %v477
      %605 = vmatpush1.msra.mxu0 %v476
      %606 = vmatprep.subr.mxu0 %v479
      %607 = vmatpush1.msra.mxu0 %v478
      %608 = vmatprep.subr.mxu0 %v481
      %609 = vmatpush1.msra.mxu0 %v480
      %610 = vmatprep.subr.mxu0 %v483
      %611 = vmatpush1.msra.mxu0 %v482
      %612 = vmatprep.subr.mxu0 %v485
      %613 = vmatpush1.msra.mxu0 %v484
      %614 = vmatprep.subr.mxu0 %v487
      %615 = vmatpush1.msra.mxu0 %v486
      %616 = vmatprep.subr.mxu0 %v489
      %617 = vmatpush1.msra.mxu0 %v488
      %618 = vmatprep.subr.mxu0 %v491
      %619 = vmatpush1.msra.mxu0 %v490
      %620 = vmatprep.subr.mxu0 %v493
      %621 = vmatpush1.msra.mxu0 %v492
      %622 = vmatprep.subr.mxu0 %v495
      %623 = vmatpush1.msra.mxu0 %v494
      %624 = vmatprep.subr.mxu0 %v497
      %625 = vmatpush1.msra.mxu0 %v496
      %626 = vmatprep.subr.mxu0 %v499
      %627 = vmatpush1.msra.mxu0 %v498
      %628 = vmatprep.mubr.f32.mxu0 %v421
      %629 = vmatmul.mubr.f32.gmra.mrb[0].mxu0 %v420
      %v630 = vpop.f32.mrb[0].mxu0
      %v631 = vadd.f32 0.0, %v630
      %v632 = vpop.f32.mrb[0].mxu0
      %v633 = vadd.f32 0.0, %v632
      %634 = vdwg.mxu0
      %635 = vmatprep.subr.mxu0 %v501
      %636 = vmatpush1.msra.mxu0 %v500
      %637 = vmatprep.subr.mxu0 %v503
      %638 = vmatpush1.msra.mxu0 %v502
      %639 = vmatprep.subr.mxu0 %v505
      %640 = vmatpush1.msra.mxu0 %v504
      %641 = vmatprep.subr.mxu0 %v507
      %642 = vmatpush1.msra.mxu0 %v506
      %643 = vmatprep.subr.mxu0 %v509
      %644 = vmatpush1.msra.mxu0 %v508
      %645 = vmatprep.subr.mxu0 %v511
      %646 = vmatpush1.msra.mxu0 %v510
      %647 = vmatprep.subr.mxu0 %v513
      %648 = vmatpush1.msra.mxu0 %v512
      %649 = vmatprep.subr.mxu0 %v515
      %650 = vmatpush1.msra.mxu0 %v514
      %651 = vmatprep.subr.mxu0 %v517
      %652 = vmatpush1.msra.mxu0 %v516
      %653 = vmatprep.subr.mxu0 %v519
      %654 = vmatpush1.msra.mxu0 %v518
      %655 = vmatprep.subr.mxu0 %v521
      %656 = vmatpush1.msra.mxu0 %v520
      %657 = vmatprep.subr.mxu0 %v523
      %658 = vmatpush1.msra.mxu0 %v522
      %659 = vmatprep.subr.mxu0 %v525
      %660 = vmatpush1.msra.mxu0 %v524
      %661 = vmatprep.subr.mxu0 %v527
      %662 = vmatpush1.msra.mxu0 %v526
      %663 = vmatprep.subr.mxu0 %v529
      %664 = vmatpush1.msra.mxu0 %v528
      %665 = vmatprep.subr.mxu0 %v531
      %666 = vmatpush1.msra.mxu0 %v530
      %667 = vmatprep.subr.mxu0 %v533
      %668 = vmatpush1.msra.mxu0 %v532
      %669 = vmatprep.subr.mxu0 %v535
      %670 = vmatpush1.msra.mxu0 %v534
      %671 = vmatprep.subr.mxu0 %v537
      %672 = vmatpush1.msra.mxu0 %v536
      %673 = vmatprep.subr.mxu0 %v539
      %674 = vmatpush1.msra.mxu0 %v538
      %675 = vmatprep.subr.mxu0 %v541
      %676 = vmatpush1.msra.mxu0 %v540
      %677 = vmatprep.subr.mxu0 %v543
      %678 = vmatpush1.msra.mxu0 %v542
      %679 = vmatprep.subr.mxu0 %v545
      %680 = vmatpush1.msra.mxu0 %v544
      %681 = vmatprep.subr.mxu0 %v547
      %682 = vmatpush1.msra.mxu0 %v546
      %683 = vmatprep.subr.mxu0 %v549
      %684 = vmatpush1.msra.mxu0 %v548
      %685 = vmatprep.subr.mxu0 %v551
      %686 = vmatpush1.msra.mxu0 %v550
      %687 = vmatprep.subr.mxu0 %v553
      %688 = vmatpush1.msra.mxu0 %v552
      %689 = vmatprep.subr.mxu0 %v555
      %690 = vmatpush1.msra.mxu0 %v554
      %691 = vmatprep.subr.mxu0 %v557
      %692 = vmatpush1.msra.mxu0 %v556
      %693 = vmatprep.subr.mxu0 %v559
      %694 = vmatpush1.msra.mxu0 %v558
      %695 = vmatprep.subr.mxu0 %v561
      %696 = vmatpush1.msra.mxu0 %v560
      %697 = vmatprep.subr.mxu0 %v563
      %698 = vmatpush1.msra.mxu0 %v562
      %699 = vmatprep.mubr.f32.mxu0 %v435
      %700 = vmatmul.mubr.f32.gmra.mrb[0].mxu0 %v428
      %v701 = vpop.f32.mrb[0].mxu0
      %v702 = vadd.f32 %v631, %v701
      %v703 = vpop.f32.mrb[0].mxu0
      %v704 = vadd.f32 %v633, %v703
      %705 = vdwg.mxu0
      %v706 = vxor.u32 %v702, 2147483648
      %v707 = vxor.u32 %v704, 2147483648
      %v708 = vmul.f32 %v706, 1.442695
      %v709 = vpow.pop %v708
      %v710 = vmul.f32 %v707, 1.442695
      %v711 = vpow.pop %v710
      %v712 = vadd.f32 %v709, 1.0
      %v713 = vadd.f32 %v711, 1.0
      %v714 = vrcp.pop %v712
      %v715 = vmul.f32 1.0, %v714
      %v716 = vrcp.pop %v713
      %v717 = vmul.f32 1.0, %v716
      %v718 = vlaneseq
      %v719 = vshrl.u32 %v718, 7
      %v720 = vsub.s32 0, %v719
      %v721 = vrot.slane %v715, %v720
      %v722 = vlaneseq
      %v723 = vshrl.u32 %v722, 7
      %v724 = vsub.s32 0, %v723
      %v725 = vrot.slane %v717, %v724
      %v726 = vmul.f32 %v402, %v721
      %v727 = vmul.f32 %v403, %v725
      %v728 = vmul.f32 %v404, %v721
      %v729 = vmul.f32 %v405, %v725
      %730 = vst [vmem:[%s197] sm:$0xff] %v726
      %731 = vst [vmem:[%s197 + $0x8] sm:$0xff] %v727
      %732 = vst [vmem:[%s197 + $0x10] sm:$0xff] %v728
      %733 = vst [vmem:[%s197 + $0x18] sm:$0xff] %v729
      %p734 = scmp.lt.s32.totalorder %s15, 1
      %s735 = scalar_select %p734, %s15, 1
      %s736 = smul.addr %s735, 4
      %s737 = smul.addr %s736, 8
      %s738 = scalar_lea.vmem %s4, %s737
      // Predicated region
      $region37: #{cbam_forward.1} parent=35 // pred_check
        %p739 = pneg %p122
      $region38: #{cbam_forward.1} parent=35 // pred_check_branch
        %741 = sbr.rel (%p739) target = $region40
      $region39: #{cbam_forward.1} parent=35 // pred_region
        _
      $region40: #{cbam_forward.1} parent=35 // pred_fallthru
        _
    $region36: #{cbam_forward.1} parent=5 // pred_fallthru
      _
    %p742 = scmp.le.s32.totalorder 2, %s10
    // Predicated region
    $region41: #{cbam_forward.1} parent=5 // pred_check
      %p743 = pneg %p742
    $region42: #{cbam_forward.1} parent=5 // pred_check_branch
      %745 = sbr.rel (%p743) target = $region44
    $region43: #{cbam_forward.1} parent=5 // pred_region
      %s746 = ssub.s32 %s10, 2
      // Predicated region
      $region45: #{cbam_forward.1} parent=43 // pred_check
        %p747 = pneg %p128
      $region46: #{cbam_forward.1} parent=43 // pred_check_branch
        %749 = sbr.rel (%p747) target = $region48
      $region47: #{cbam_forward.1} parent=43 // pred_region
        %p750 = scmp.lt.s32.totalorder %s16, 1
        %s751 = scalar_select %p750, %s16, 1
        %s752 = smul.addr %s751, 4
        %s753 = smul.addr %s752, 8
        %s754 = scalar_lea.vmem %s4, %s753
      $region48: #{cbam_forward.1} parent=43 // pred_fallthru
        _
    $region44: #{cbam_forward.1} parent=5 // pred_fallthru
      _
  $region6: #{cbam_forward.1} parent=0 // loop_footer
    %s14 = sadd.s32 1, %s10
  $region7: #{cbam_forward.1} parent=0 // loop_footer_branch
    %9 = sbr.rel target = $region3
  $region8: #{cbam_forward.1} parent=0 // loop_exit
    _

</llo_original>
